<compile_context>
chip_gen: v7x
topology: tpu7x:2x2x1
jax: 0.10.0
libtpu: 0.0.40
codegen_flags: <defaults>
</compile_context>

<pallas_src>
import jax
import jax.numpy as jnp
from jax.experimental import pallas as pl
from jax.experimental.pallas import tpu as pltpu

LANE = 128
IN_FEATURES = 56


# ------------------------------- kernel -------------------------------------

def mlp_kernel(x_ref, w1_ref, w2_ref, w345_ref, b_ref, o_ref):
    """One batch tile of the 5-layer MLP.

    x_ref    : (TM, 56)       f32   activations for this tile
    w1_ref   : (56, 256)      bf16
    w2_ref   : (256, 128)     bf16
    w345_ref : (3, 128, 128)  bf16  [w3 pad, w4 pad, row0 = [w5 ; b5] pad]
    b_ref    : (4, 256)       bf16  rows = b1(256), b2(128), b3(128), b4+[1.0]
    o_ref    : (8, TM)        f32   row 0 holds the logits, rows 1..7 are zero
    """
    x = x_ref[...].astype(jnp.bfloat16)

    # Layer 1: 56 -> 256 (bf16 epilogue)
    h = jnp.dot(x, w1_ref[...], preferred_element_type=jnp.float32)
    h = jnp.maximum(h.astype(jnp.bfloat16) + b_ref[0:1, :], 0)

    # Layer 2: 256 -> 128
    h = jnp.dot(h, w2_ref[...], preferred_element_type=jnp.float32)
    h = jnp.maximum(h.astype(jnp.bfloat16) + b_ref[1:2, :LANE], 0)

    # Layer 3: 128 -> 64 (zero-padded to 128 lanes)
    h = jnp.dot(h, w345_ref[0], preferred_element_type=jnp.float32)
    h = jnp.maximum(h.astype(jnp.bfloat16) + b_ref[2:3, :LANE], 0)

    # Layer 4: 64 -> 32 (padded).  Kept f32: it feeds the transpose below.
    # b4 carries a 1.0 at lane 32 (w4 column 32 is all zeros), so h[:, 32] == 1
    # and the final layer's bias rides through the last matmul.
    h = jnp.dot(h, w345_ref[1], preferred_element_type=jnp.float32)
    h = jnp.maximum(h + b_ref[3:4, :LANE], 0.0)

    # Layer 5: 32 -> 1, computed transposed so the result is lane-dense.
    #   ht  : (128, TM)  batch along lanes (single XLU transpose per tile)
    #   res : (8, TM)    row 0 = w5 . h4 + b5 ; rows 1..7 = 0 (zero weight rows)
    ht = jnp.transpose(h).astype(jnp.bfloat16)
    o_ref[...] = jnp.dot(w345_ref[2, 0:8, :], ht,
                         preferred_element_type=jnp.float32)


# ----------------------------- parameters -----------------------------------

def _init_linear(key, fan_in, fan_out, dtype=jnp.float32):
    """Matches torch.nn.Linear default init U(-1/sqrt(in), 1/sqrt(in)).

    Returns (W_T, b) with W_T shaped (in, out), b shaped (1, out), both f32."""
    kw, kb = jax.random.split(key)
    bound = 1.0 / jnp.sqrt(jnp.asarray(fan_in, dtype))
    w_t = jax.random.uniform(kw, (fan_in, fan_out), dtype, minval=-bound, maxval=bound)
    b = jax.random.uniform(kb, (1, fan_out), dtype, minval=-bound, maxval=bound)
    return w_t, b


def make_params(key):
    sizes = [(56, 256), (256, 128), (128, 64), (64, 32), (32, 1)]
    keys = jax.random.split(key, len(sizes))
    params = []
    for k, (fi, fo) in zip(keys, sizes):
        params.extend(_init_linear(k, fi, fo))
    return params  # [w1,b1,...,w5,b5] in f32, weights (in,out), biases (1,out)


def _pad2(a, rows, cols):
    return jnp.pad(a, ((0, rows - a.shape[0]), (0, cols - a.shape[1])))


def prepare_params(params):
    """Consolidate/pad params into the 4 kernel operands (w1, w2, w345, bstack)."""
    w1, b1, w2, b2, w3, b3, w4, b4, w5, b5 = params

    w3p = _pad2(w3, LANE, LANE)                               # (128,64) -> (128,128)
    w4p = _pad2(w4, LANE, LANE)                               # (64,32)  -> (128,128)
    # Final layer stored row-major (row 0 = w5 column) with b5 folded in at
    # lane 32; lane 32 of the layer-4 activations is forced to 1.0 via b4aug.
    w5_row = jnp.concatenate([w5[:, 0], b5.reshape(-1)])      # (33,)
    w5r = jnp.zeros((LANE, LANE), w5.dtype).at[0, :33].set(w5_row)
    w345 = jnp.stack([w3p, w4p, w5r]).astype(jnp.bfloat16)    # (3,128,128)

    b4aug = jnp.concatenate([b4.reshape(-1), jnp.ones((1,), b4.dtype)])  # (33,)

    def _padrow(v, n=256):
        v = v.reshape(-1)
        return jnp.pad(v, (0, n - v.shape[0]))

    bstack = jnp.stack([_padrow(b1), _padrow(b2), _padrow(b3), _padrow(b4aug)]
                       ).astype(jnp.bfloat16)                 # (4,256)

    return (w1.astype(jnp.bfloat16), w2.astype(jnp.bfloat16), w345, bstack)


# ------------------------------- wrapper ------------------------------------

def _cdiv(a, b):
    return -(-a // b)


def _round_up(a, m):
    return ((a + m - 1) // m) * m


def _select_tile(batch, tm_max):
    """Batch tile size (rows) and number of grid tiles.

    - tm <= tm_max, tm a multiple of 8 (16 for larger tiles).
    - at least 2 tiles when batch >= 32 so v7x's 2 TensorCores both get work.
    - tm chosen from cdiv(batch, num_tiles) so the edge tile wastes few rows
      (no more rounding the batch up to a multiple of a fixed TM).
    """
    if batch <= 8:
        return batch, 1
    min_tiles = 2 if batch >= 32 else 1
    num_tiles = max(min_tiles, _cdiv(batch, tm_max))
    tm = _cdiv(batch, num_tiles)
    tm = _round_up(tm, 16 if tm >= 64 else 8)
    tm = min(tm, tm_max, _round_up(batch, 8))
    num_tiles = _cdiv(batch, tm)
    return tm, num_tiles


def neural_network_4hidden(x, params, tm_max=2048):
    """x: (B, ...) whose trailing dims flatten to 56.  Returns (B, 1) float32.

    Precision contract: weights/activations feed the MXU as bf16 with f32
    accumulation (see _reference_matched for the exact recipe)."""
    batch = x.shape[0]
    x2d = x.reshape(batch, -1)
    assert x2d.shape[1] == IN_FEATURES, f"expected 56 features, got {x2d.shape[1]}"
    if x2d.dtype != jnp.float32:
        x2d = x2d.astype(jnp.float32)

    w1b, w2b, w345, bstack = prepare_params(params)

    tm, num_tiles = _select_tile(batch, tm_max)
    rows = num_tiles * tm  # rows actually processed (edge tile may read OOB
                           # rows; those results are sliced off below)

    in_specs = [
        pl.BlockSpec((tm, IN_FEATURES), lambda i: (i, 0)),     # x: streamed
        pl.BlockSpec((IN_FEATURES, 256), lambda i: (0, 0)),    # w1: resident
        pl.BlockSpec((256, LANE), lambda i: (0, 0)),           # w2: resident
        pl.BlockSpec((3, LANE, LANE), lambda i: (0, 0, 0)),    # w3/w4/w5row
        pl.BlockSpec((4, 256), lambda i: (0, 0)),              # biases
    ]
    # Lane-dense output: one (8, tm) f32 block per tile, row 0 = logits.
    out_spec = pl.BlockSpec((None, 8, tm), lambda i: (i, 0, 0))

    flops = 2 * rows * (56 * 256 + 256 * 128 + 2 * 128 * 128 + 8 * 128)
    param_bytes = sum(int(p.size) * p.dtype.itemsize
                      for p in (w1b, w2b, w345, bstack))
    bytes_accessed = batch * IN_FEATURES * 4 + rows * 8 * 4 + param_bytes

    out3 = pl.pallas_call(
        mlp_kernel,
        out_shape=jax.ShapeDtypeStruct((num_tiles, 8, tm), jnp.float32),
        grid_spec=pltpu.PrefetchScalarGridSpec(
            num_scalar_prefetch=0,
            grid=(num_tiles,),
            in_specs=in_specs,
            out_specs=out_spec,
        ),
        compiler_params=pltpu.CompilerParams(
            dimension_semantics=("parallel",),
            vmem_limit_bytes=32 * 1024 * 1024,  # keep <=32MiB: v7x has 64MiB total
        ),
        cost_estimate=pl.CostEstimate(
            flops=flops, transcendentals=0, bytes_accessed=bytes_accessed),
    )(x2d, w1b, w2b, w345, bstack)

    # (num_tiles, 8, tm): row 0 of each tile holds the logits, lane m of tile i
    # corresponds to global batch row i*tm + m.
    return out3[:, 0, :].reshape(rows)[:batch].reshape(batch, 1)


# ------------------------------ references ----------------------------------

def _reference_matched(x, prepared):
    """Pure-JAX reference with the identical bf16/padding recipe as the kernel."""
    w1, w2, w345, bstack = prepared
    h = x.reshape(x.shape[0], -1).astype(jnp.bfloat16)
    h = jnp.dot(h, w1, preferred_element_type=jnp.float32)
    h = jnp.maximum(h.astype(jnp.bfloat16) + bstack[0:1, :], 0)
    h = jnp.dot(h, w2, preferred_element_type=jnp.float32)
    h = jnp.maximum(h.astype(jnp.bfloat16) + bstack[1:2, :LANE], 0)
    h = jnp.dot(h, w345[0], preferred_element_type=jnp.float32)
    h = jnp.maximum(h.astype(jnp.bfloat16) + bstack[2:3, :LANE], 0)
    h = jnp.dot(h, w345[1], preferred_element_type=jnp.float32)
    h = jnp.maximum(h + bstack[3:4, :LANE], 0.0)                       # f32
    res = jnp.dot(h.astype(jnp.bfloat16), jnp.transpose(w345[2]),
                  preferred_element_type=jnp.float32)                  # (B,128)
    return res[:, :1]                                                  # b5 folded in


def _reference_f32(x, params):
    """Plain f32 reference of the original module (semantic check, loose tol)."""
    batch = x.shape[0]
    h = x.reshape(batch, -1).astype(jnp.float32)
    w1, b1, w2, b2, w3, b3, w4, b4, w5, b5 = params
    h = jnp.maximum(h @ w1 + b1, 0.0)
    h = jnp.maximum(h @ w2 + b2, 0.0)
    h = jnp.maximum(h @ w3 + b3, 0.0)
    h = jnp.maximum(h @ w4 + b4, 0.0)
    return h @ w5 + b5


# --------------------------------- main --------------------------------------

if __name__ == "__main__":
    key = jax.random.PRNGKey(0)
    k_params, k_x = jax.random.split(key)

    params = make_params(k_params)
    prepared = prepare_params(params)

    # Small deterministic input: batch=8, features flatten to 56 (7x8 grid).
    x = jax.random.normal(k_x, (8, 7, 8), dtype=jnp.float32)

    out = neural_network_4hidden(x, params)
    out = jax.block_until_ready(out)
    assert out.shape == (8, 1)

    # Exact-recipe (bf16 + padding + folded bias) reference: tight tolerance.
    ref_matched = _reference_matched(x, prepared)
    assert jnp.allclose(out, ref_matched, atol=2e-3, rtol=2e-3), \
        "mismatch vs bf16-matched reference"

    # Original f32 module semantics: loose tolerance for bf16 matmul error.
    ref_f32 = _reference_f32(x, params)
    assert jnp.allclose(out, ref_f32, atol=5e-2, rtol=5e-2), \
        "mismatch vs f32 reference"

    # Edge-block check: batch not a multiple of the tile (2 tiles, partial edge).
    x_odd = jax.random.normal(jax.random.PRNGKey(1), (37, 7, 8), dtype=jnp.float32)
    out_odd = jax.block_until_ready(neural_network_4hidden(x_odd, params))
    assert out_odd.shape == (37, 1)
    ref_odd = _reference_matched(x_odd, prepared)
    assert jnp.allclose(out_odd, ref_odd, atol=2e-3, rtol=2e-3), \
        "mismatch vs bf16-matched reference (odd batch / edge tile)"

    print("KERNEL_OK")
</pallas_src>

<mosaic_0001>
module attributes {stable_mosaic.version = 11 : i64} {
  func.func @mlp_kernel(%arg0: i32, %arg1: memref<8x56xf32, #tpu.memory_space<vmem>>, %arg2: memref<56x256xbf16, #tpu.memory_space<vmem>>, %arg3: memref<256x128xbf16, #tpu.memory_space<vmem>>, %arg4: memref<3x128x128xbf16, #tpu.memory_space<vmem>>, %arg5: memref<4x256xbf16, #tpu.memory_space<vmem>>, %arg6: memref<1x8x8xf32, #tpu.memory_space<vmem>>) attributes {dimension_semantics = [#tpu.dimension_semantics<parallel>], iteration_bounds = array<i64: 1>, scalar_prefetch = 0 : i64, scratch_operands = 0 : i64, tpu.core_type = #tpu.core_type<tc>, window_params = [{transform_indices = @transform_0, window_bounds = array<i64: 8, 56>}, {pipeline_mode = #tpu.pipeline_mode<synchronous>, transform_indices = @transform_1, window_bounds = array<i64: 56, 256>}, {pipeline_mode = #tpu.pipeline_mode<synchronous>, transform_indices = @transform_2, window_bounds = array<i64: 256, 128>}, {pipeline_mode = #tpu.pipeline_mode<synchronous>, transform_indices = @transform_3, window_bounds = array<i64: 3, 128, 128>}, {pipeline_mode = #tpu.pipeline_mode<synchronous>, transform_indices = @transform_4, window_bounds = array<i64: 4, 256>}, {transform_indices = @transform_5, window_bounds = array<i64: 1, 8, 8>}]} {
    %c0 = arith.constant 0 : index
    %c0_0 = arith.constant 0 : index
    %0 = vector.load %arg1[%c0, %c0_0] : memref<8x56xf32, #tpu.memory_space<vmem>>, vector<8x56xf32>
    %1 = arith.truncf %0 : vector<8x56xf32> to vector<8x56xbf16>
    %c0_1 = arith.constant 0 : index
    %c0_2 = arith.constant 0 : index
    %2 = vector.load %arg2[%c0_1, %c0_2] : memref<56x256xbf16, #tpu.memory_space<vmem>>, vector<56x256xbf16>
    %cst = arith.constant dense<0.000000e+00> : vector<8x256xf32>
    %3 = tpu.matmul %1, %2, %cst {dimension_numbers = #tpu.dot_dimension_numbers<[1], [0], [0], [1], [0, 0, 1, 1], [], []>} : vector<8x56xbf16>, vector<56x256xbf16>, vector<8x256xf32> -> vector<8x256xf32>
    %4 = arith.truncf %3 : vector<8x256xf32> to vector<8x256xbf16>
    %c0_3 = arith.constant 0 : index
    %c0_4 = arith.constant 0 : index
    %5 = vector.load %arg5[%c0_3, %c0_4] : memref<4x256xbf16, #tpu.memory_space<vmem>>, vector<1x256xbf16>
    %6 = vector.broadcast %5 : vector<1x256xbf16> to vector<8x256xbf16>
    %7 = arith.addf %4, %6 : vector<8x256xbf16>
    %cst_5 = arith.constant 0.000000e+00 : bf16
    %8 = vector.broadcast %cst_5 : bf16 to vector<8x256xbf16>
    %9 = arith.maximumf %7, %8 : vector<8x256xbf16>
    %c0_6 = arith.constant 0 : index
    %c0_7 = arith.constant 0 : index
    %10 = vector.load %arg3[%c0_6, %c0_7] : memref<256x128xbf16, #tpu.memory_space<vmem>>, vector<256x128xbf16>
    %cst_8 = arith.constant dense<0.000000e+00> : vector<8x128xf32>
    %11 = tpu.matmul %9, %10, %cst_8 {dimension_numbers = #tpu.dot_dimension_numbers<[1], [0], [0], [1], [0, 0, 1, 1], [], []>} : vector<8x256xbf16>, vector<256x128xbf16>, vector<8x128xf32> -> vector<8x128xf32>
    %12 = arith.truncf %11 : vector<8x128xf32> to vector<8x128xbf16>
    %c1 = arith.constant 1 : index
    %c0_9 = arith.constant 0 : index
    %13 = vector.load %arg5[%c1, %c0_9] : memref<4x256xbf16, #tpu.memory_space<vmem>>, vector<1x128xbf16>
    %14 = vector.broadcast %13 : vector<1x128xbf16> to vector<8x128xbf16>
    %15 = arith.addf %12, %14 : vector<8x128xbf16>
    %cst_10 = arith.constant 0.000000e+00 : bf16
    %16 = vector.broadcast %cst_10 : bf16 to vector<8x128xbf16>
    %17 = arith.maximumf %15, %16 : vector<8x128xbf16>
    %c0_11 = arith.constant 0 : index
    %c0_12 = arith.constant 0 : index
    %c0_13 = arith.constant 0 : index
    %18 = vector.load %arg4[%c0_11, %c0_12, %c0_13] : memref<3x128x128xbf16, #tpu.memory_space<vmem>>, vector<1x128x128xbf16>
    %19 = vector.shape_cast %18 : vector<1x128x128xbf16> to vector<128x128xbf16>
    %cst_14 = arith.constant dense<0.000000e+00> : vector<8x128xf32>
    %20 = tpu.matmul %17, %19, %cst_14 {dimension_numbers = #tpu.dot_dimension_numbers<[1], [0], [0], [1], [0, 0, 1, 1], [], []>} : vector<8x128xbf16>, vector<128x128xbf16>, vector<8x128xf32> -> vector<8x128xf32>
    %21 = arith.truncf %20 : vector<8x128xf32> to vector<8x128xbf16>
    %c2 = arith.constant 2 : index
    %c0_15 = arith.constant 0 : index
    %22 = vector.load %arg5[%c2, %c0_15] : memref<4x256xbf16, #tpu.memory_space<vmem>>, vector<1x128xbf16>
    %23 = vector.broadcast %22 : vector<1x128xbf16> to vector<8x128xbf16>
    %24 = arith.addf %21, %23 : vector<8x128xbf16>
    %cst_16 = arith.constant 0.000000e+00 : bf16
    %25 = vector.broadcast %cst_16 : bf16 to vector<8x128xbf16>
    %26 = arith.maximumf %24, %25 : vector<8x128xbf16>
    %c1_17 = arith.constant 1 : index
    %c0_18 = arith.constant 0 : index
    %c0_19 = arith.constant 0 : index
    %27 = vector.load %arg4[%c1_17, %c0_18, %c0_19] : memref<3x128x128xbf16, #tpu.memory_space<vmem>>, vector<1x128x128xbf16>
    %28 = vector.shape_cast %27 : vector<1x128x128xbf16> to vector<128x128xbf16>
    %cst_20 = arith.constant dense<0.000000e+00> : vector<8x128xf32>
    %29 = tpu.matmul %26, %28, %cst_20 {dimension_numbers = #tpu.dot_dimension_numbers<[1], [0], [0], [1], [0, 0, 1, 1], [], []>} : vector<8x128xbf16>, vector<128x128xbf16>, vector<8x128xf32> -> vector<8x128xf32>
    %c3 = arith.constant 3 : index
    %c0_21 = arith.constant 0 : index
    %30 = vector.load %arg5[%c3, %c0_21] : memref<4x256xbf16, #tpu.memory_space<vmem>>, vector<1x128xbf16>
    %31 = arith.extf %30 : vector<1x128xbf16> to vector<1x128xf32>
    %32 = vector.broadcast %31 : vector<1x128xf32> to vector<8x128xf32>
    %33 = arith.addf %29, %32 : vector<8x128xf32>
    %cst_22 = arith.constant 0.000000e+00 : f32
    %34 = vector.broadcast %cst_22 : f32 to vector<8x128xf32>
    %35 = arith.maximumf %33, %34 : vector<8x128xf32>
    %36 = tpu.transpose %35, [1, 0] : vector<8x128xf32> -> vector<128x8xf32>
    %37 = arith.truncf %36 : vector<128x8xf32> to vector<128x8xbf16>
    %c2_23 = arith.constant 2 : index
    %c0_24 = arith.constant 0 : index
    %c0_25 = arith.constant 0 : index
    %38 = vector.load %arg4[%c2_23, %c0_24, %c0_25] : memref<3x128x128xbf16, #tpu.memory_space<vmem>>, vector<1x8x128xbf16>
    %39 = vector.shape_cast %38 : vector<1x8x128xbf16> to vector<8x128xbf16>
    %cst_26 = arith.constant dense<0.000000e+00> : vector<8x8xf32>
    %40 = tpu.matmul %39, %37, %cst_26 {dimension_numbers = #tpu.dot_dimension_numbers<[1], [0], [0], [1], [0, 0, 1, 1], [], []>} : vector<8x128xbf16>, vector<128x8xbf16>, vector<8x8xf32> -> vector<8x8xf32>
    %c0_27 = arith.constant 0 : index
    %c0_28 = arith.constant 0 : index
    %c0_29 = arith.constant 0 : index
    %41 = vector.load %arg6[%c0_27, %c0_28, %c0_29] : memref<1x8x8xf32, #tpu.memory_space<vmem>>, vector<1x8x8xf32>
    %42 = vector.shape_cast %41 : vector<1x8x8xf32> to vector<8x8xf32>
    %43 = vector.shape_cast %40 : vector<8x8xf32> to vector<1x8x8xf32>
    tpu.vector_store %arg6[%c0_27, %c0_28, %c0_29], %43 {strides = array<i32>} : memref<1x8x8xf32, #tpu.memory_space<vmem>>, vector<1x8x8xf32>,
    return
  }
  func.func @transform_0(%arg0: i32) -> (i32, i32) {
    %c0_i32 = arith.constant 0 : i32
    %c0_i32_0 = arith.constant 0 : i32
    return %arg0, %c0_i32 : i32, i32
  }
  func.func @transform_1(%arg0: i32) -> (i32, i32) {
    %c0_i32 = arith.constant 0 : i32
    %c0_i32_0 = arith.constant 0 : i32
    %c0_i32_1 = arith.constant 0 : i32
    return %c0_i32, %c0_i32_0 : i32, i32
  }
  func.func @transform_2(%arg0: i32) -> (i32, i32) {
    %c0_i32 = arith.constant 0 : i32
    %c0_i32_0 = arith.constant 0 : i32
    %c0_i32_1 = arith.constant 0 : i32
    return %c0_i32, %c0_i32_0 : i32, i32
  }
  func.func @transform_3(%arg0: i32) -> (i32, i32, i32) {
    %c0_i32 = arith.constant 0 : i32
    %c0_i32_0 = arith.constant 0 : i32
    %c0_i32_1 = arith.constant 0 : i32
    %c0_i32_2 = arith.constant 0 : i32
    return %c0_i32, %c0_i32_0, %c0_i32_1 : i32, i32, i32
  }
  func.func @transform_4(%arg0: i32) -> (i32, i32) {
    %c0_i32 = arith.constant 0 : i32
    %c0_i32_0 = arith.constant 0 : i32
    %c0_i32_1 = arith.constant 0 : i32
    return %c0_i32, %c0_i32_0 : i32, i32
  }
  func.func @transform_5(%arg0: i32) -> (i32, i32, i32) {
    %c0_i32 = arith.constant 0 : i32
    %c0_i32_0 = arith.constant 0 : i32
    %c0_i32_1 = arith.constant 0 : i32
    return %arg0, %c0_i32, %c0_i32_0 : i32, i32, i32
  }
}

</mosaic_0001>

<llo_original>
// kernel: tpu_custom_call.1
$region0: #{tpu_custom_call.1}
  #allocation0 [shape = 'u32[]', space=smem, size = 0x4, offset = 0x4, fixed_abs, tag = 'smem constant byte address 0x4 - core index']
  #allocation1 [shape = 'u32[144,128]{1,0:T(1,128)}', space=vmem, size = 0x12000, scoped, tag = 'internal scratch']
  %s0 = inlined_call_operand.hbm [shape: f32[8,56], index: 0, kind: input, shape index: {}]
  %s1 = inlined_call_operand.hbm [shape: bf16[56,256], index: 1, kind: input, shape index: {}]
  %s2 = inlined_call_operand.hbm [shape: bf16[256,128], index: 2, kind: input, shape index: {}]
  %s3 = inlined_call_operand.hbm [shape: bf16[3,128,128], index: 3, kind: input, shape index: {}]
  %s4 = inlined_call_operand.vmem [shape: bf16[4,256], index: 4, kind: input, shape index: {}]
  %s5 = inlined_call_operand.hbm [shape: f32[1,8,8], index: 5, kind: output, shape index: {}]
  %s6 = sld [smem:[#allocation0]]
  $region46: #{tpu_custom_call.1} parent=0
    _
  %s8 = ssub.s32 1, %s6
  %s9 = scalar_select 0, %s8, %s6
  $region1: #{tpu_custom_call.1} parent=0
    #allocation2 [shape = 'u8[4096]{0}', space=vmem, size = 0x1000, scoped, tag = 'input window, operand 0, single buffered']
    #allocation3 [shape = 's32[1]{0}', space=sflag, size = 0x4, scoped, tag = 'scoped memory for tpu_custom_call.1']
    #allocation4 [shape = 's32[1]{0}', space=sflag, size = 0x4, scoped, tag = 'scoped memory for tpu_custom_call.1']
    #allocation5 [shape = 'u8[28672]{0}', space=vmem, size = 0x7000, scoped, tag = 'input window, operand 1, single buffered']
    #allocation6 [shape = 's32[1]{0}', space=sflag, size = 0x4, scoped, tag = 'scoped memory for tpu_custom_call.1']
    #allocation7 [shape = 'u8[65536]{0}', space=vmem, size = 0x10000, scoped, tag = 'input window, operand 2, single buffered']
    #allocation8 [shape = 'u8[98304]{0}', space=vmem, size = 0x18000, scoped, tag = 'input window, operand 3, single buffered']
    #allocation9 [shape = 's32[1]{0}', space=sflag, size = 0x4, scoped, tag = 'scoped memory for tpu_custom_call.1']
    #allocation10 [shape = 'u8[4096]{0}', space=vmem, size = 0x1000, scoped, tag = 'output window, operand 0, single buffered']
    %10 = vsyncpa [#allocation3], 0
    %11 = vsyncpa [#allocation6], 0
    %12 = vsyncpa [#allocation9], 0
    %13 = vsyncpa [#allocation4], 0
    // Predicated region
    $region2: #{tpu_custom_call.1} parent=1 // pred_check
      _
    $region3: #{tpu_custom_call.1} parent=1 // pred_check_branch
      %15 = sbr.rel (0) target = $region5
    $region4: #{tpu_custom_call.1} parent=1 // pred_region
      %s17 = ssub.s32 128, 128
      %18 = vsyncadd [#allocation3], %s17
      %s20 = sshll.u32 [#allocation2], 4
      %s21 = int_to_ptr.vmem [resolvable:$true] %s20
      %23 = dma.hbm_to_vmem [thread:$0]  %s0, 128, %s21, [#allocation3]
    $region5: #{tpu_custom_call.1} parent=1 // pred_fallthru
      _
    // Predicated region
    $region6: #{tpu_custom_call.1} parent=1 // pred_check
      _
    $region7: #{tpu_custom_call.1} parent=1 // pred_check_branch
      %25 = sbr.rel (0) target = $region9
    $region8: #{tpu_custom_call.1} parent=1 // pred_region
      %s27 = ssub.s32 896, 896
      %28 = vsyncadd [#allocation6], %s27
      %s29 = sshll.u32 [#allocation5], 4
      %s30 = int_to_ptr.vmem [resolvable:$true] %s29
      %35 = dma.hbm_to_vmem [thread:$0]  %s1, 896, %s30, [#allocation6], 128, 128, 8
    $region9: #{tpu_custom_call.1} parent=1 // pred_fallthru
      _
    // Predicated region
    $region10: #{tpu_custom_call.1} parent=1 // pred_check
      _
    $region11: #{tpu_custom_call.1} parent=1 // pred_check_branch
      %37 = sbr.rel (0) target = $region13
    $region12: #{tpu_custom_call.1} parent=1 // pred_region
      %s39 = ssub.s32 2048, 2048
      %40 = vsyncadd [#allocation6], %s39
      %s41 = sshll.u32 [#allocation7], 4
      %s42 = int_to_ptr.vmem [resolvable:$true] %s41
      %47 = dma.hbm_to_vmem [thread:$0]  %s2, 2048, %s42, [#allocation6], 64, 64, 4
    $region13: #{tpu_custom_call.1} parent=1 // pred_fallthru
      _
    // Predicated region
    $region14: #{tpu_custom_call.1} parent=1 // pred_check
      _
    $region15: #{tpu_custom_call.1} parent=1 // pred_check_branch
      %49 = sbr.rel (0) target = $region17
    $region16: #{tpu_custom_call.1} parent=1 // pred_region
      %s51 = ssub.s32 3072, 3072
      %52 = vsyncadd [#allocation9], %s51
      %s53 = sshll.u32 [#allocation8], 4
      %s54 = int_to_ptr.vmem [resolvable:$true] %s53
      %59 = dma.hbm_to_vmem [thread:$0]  %s3, 3072, %s54, [#allocation9], 64, 64, 4
    $region17: #{tpu_custom_call.1} parent=1 // pred_fallthru
      _
    // Predicated region
    $region18: #{tpu_custom_call.1} parent=1 // pred_check
      _
    $region19: #{tpu_custom_call.1} parent=1 // pred_check_branch
      %61 = sbr.rel (0) target = $region21
    $region20: #{tpu_custom_call.1} parent=1 // pred_region
      _
    $region21: #{tpu_custom_call.1} parent=1 // pred_fallthru
      _
    // Predicated region
    $region22: #{tpu_custom_call.1} parent=1 // pred_check
      _
    $region23: #{tpu_custom_call.1} parent=1 // pred_check_branch
      %63 = sbr.rel (0) target = $region25
    $region24: #{tpu_custom_call.1} parent=1 // pred_region
      %64 = dma.done [#allocation3], 128
    $region25: #{tpu_custom_call.1} parent=1 // pred_fallthru
      _
    // Predicated region
    $region26: #{tpu_custom_call.1} parent=1 // pred_check
      _
    $region27: #{tpu_custom_call.1} parent=1 // pred_check_branch
      %66 = sbr.rel (0) target = $region29
    $region28: #{tpu_custom_call.1} parent=1 // pred_region
      %67 = dma.done [#allocation6], 896
    $region29: #{tpu_custom_call.1} parent=1 // pred_fallthru
      _
    // Predicated region
    $region30: #{tpu_custom_call.1} parent=1 // pred_check
      _
    $region31: #{tpu_custom_call.1} parent=1 // pred_check_branch
      %69 = sbr.rel (0) target = $region33
    $region32: #{tpu_custom_call.1} parent=1 // pred_region
      %70 = dma.done [#allocation6], 2048
    $region33: #{tpu_custom_call.1} parent=1 // pred_fallthru
      _
    // Predicated region
    $region34: #{tpu_custom_call.1} parent=1 // pred_check
      _
    $region35: #{tpu_custom_call.1} parent=1 // pred_check_branch
      %72 = sbr.rel (0) target = $region37
    $region36: #{tpu_custom_call.1} parent=1 // pred_region
      %73 = dma.done [#allocation9], 3072
    $region37: #{tpu_custom_call.1} parent=1 // pred_fallthru
      _
    %v75 = vld [vmem:[#allocation2] sm:$0xff]
    %v76 = vpack.c.bf16 %v75, %v75
    %v77 = vld [vmem:[#allocation5] sm:$0xff]
    %v78 = vld [vmem:[#allocation5 + $0x8] sm:$0xff]
    %v79 = vld [vmem:[#allocation5 + $0x10] sm:$0xff]
    %v80 = vld [vmem:[#allocation5 + $0x18] sm:$0xff]
    %v81 = vld [vmem:[#allocation5 + $0x20] sm:$0xff]
    %v82 = vld [vmem:[#allocation5 + $0x28] sm:$0xff]
    %v83 = vld [vmem:[#allocation5 + $0x30] sm:$0xff]
    %v91 = vunpack.c.l.b16 %v77
    %v92 = vunpack.c.h.b16 %v77
    %v93 = vunpack.c.l.b16 %v78
    %v94 = vunpack.c.h.b16 %v78
    %v95 = vunpack.c.l.b16 %v79
    %v96 = vunpack.c.h.b16 %v79
    %v97 = vunpack.c.l.b16 %v80
    %v98 = vunpack.c.h.b16 %v80
    %v99 = vunpack.c.l.b16 %v81
    %v100 = vunpack.c.h.b16 %v81
    %v101 = vunpack.c.l.b16 %v82
    %v102 = vunpack.c.h.b16 %v82
    %v103 = vunpack.c.l.b16 %v83
    %v104 = vunpack.c.h.b16 %v83
    %v105 = vpack.c.b16 %v93, %v91
    %v106 = vpack.c.b16 %v94, %v92
    %v107 = vpack.c.b16 %v97, %v95
    %v108 = vpack.c.b16 %v98, %v96
    %v109 = vpack.c.b16 %v101, %v99
    %v110 = vpack.c.b16 %v102, %v100
    %v111 = vpack.c.b16 %v103, %v103
    %v112 = vpack.c.b16 %v104, %v104
    %vm119 = vcmask 457728
    %v121 = vsel %vm119, %v76, 0
    %vm123 = vcmask 1043456
    %v125 = vsel %vm123, %v111, 0
    %v128 = vsel %vm123, %v112, 0
    %130 = vmatprep.subr.bf16.mxu0 %v106
    %131 = vmatpush1.bf16.msra.mxu0 %v105
    %132 = vmatprep.subr.bf16.mxu0 %v108
    %133 = vmatpush1.bf16.msra.mxu0 %v107
    %134 = vmatprep.subr.bf16.mxu0 %v110
    %135 = vmatpush1.bf16.msra.mxu0 %v109
    %136 = vmatprep.subr.bf16.mxu0 %v128
    %137 = vmatpush1.bf16.msra.mxu0 %v125
    %138 = vmatprep.subr.bf16.mxu0 0
    %139 = vmatpush1.bf16.msra.mxu0 0
    %140 = vmatprep.subr.bf16.mxu0 0
    %141 = vmatpush1.bf16.msra.mxu0 0
    %142 = vmatprep.subr.bf16.mxu0 0
    %143 = vmatpush1.bf16.msra.mxu0 0
    %144 = vmatprep.subr.bf16.mxu0 0
    %145 = vmatpush1.bf16.msra.mxu0 0
    %146 = vmatprep.subr.bf16.mxu0 0
    %147 = vmatpush1.bf16.msra.mxu0 0
    %148 = vmatprep.subr.bf16.mxu0 0
    %149 = vmatpush1.bf16.msra.mxu0 0
    %150 = vmatprep.subr.bf16.mxu0 0
    %151 = vmatpush1.bf16.msra.mxu0 0
    %152 = vmatprep.subr.bf16.mxu0 0
    %153 = vmatpush1.bf16.msra.mxu0 0
    %154 = vmatprep.subr.bf16.mxu0 0
    %155 = vmatpush1.bf16.msra.mxu0 0
    %156 = vmatprep.subr.bf16.mxu0 0
    %157 = vmatpush1.bf16.msra.mxu0 0
    %158 = vmatprep.subr.bf16.mxu0 0
    %159 = vmatpush1.bf16.msra.mxu0 0
    %160 = vmatprep.subr.bf16.mxu0 0
    %161 = vmatpush1.bf16.msra.mxu0 0
    %162 = vmatprep.mubr.bf16.mxu0 0
    %163 = vmatmul.mubr.bf16.gmra.mrb[0].mxu0 %v121
    %v164 = vpop.f32.mrb[0].mxu0
    %v165 = vadd.f32 0.0, %v164
    %v166 = vpop.f32.mrb[0].mxu0
    %v167 = vadd.f32 0.0, %v166
    %v168 = vpop.f32.mrb[0].mxu0
    %v169 = vpop.f32.mrb[0].mxu0
    %170 = vdwg.mxu0
    %v171 = vpack.c.bf16 %v165, %v165
    %v172 = vpack.c.bf16 %v167, %v167
    %v173 = vld [vmem:[%s4] sm:$0x5]
    %v176 = vunpack.c.l.s4 1983009808
    %v177 = vunpack.c.0.s8 %v176
    %v178 = vlaneseq
    %v179 = vshrl.u32 %v178, 7
    %v180 = vsub.s32 %v177, %v179
    %v181 = vrot.slane %v173, %v180
    %v182 = vcombine.high %v181, %v181
    %v184 = vpack.i.b16 %v181, %v181
    %v186 = vlaneseq
    %v187 = vshrl.u32 %v186, 7
    %v188 = vsub.s32 0, %v187
    %v189 = vrot.slane %v184, %v188
    %v191 = vpack.i.b16 %v182, %v182
    %v193 = vlaneseq
    %v194 = vshrl.u32 %v193, 7
    %v195 = vsub.s32 0, %v194
    %v196 = vrot.slane %v191, %v195
    %v197 = vadd.bf16 %v171, %v189
    %v198 = vadd.bf16 %v172, %v196
    %v199 = vmax.bf16 %v197, 0
    %v200 = vmax.bf16 %v198, 0
    %v201 = vld [vmem:[#allocation7] sm:$0xf]
    %v202 = vld [vmem:[#allocation7 + $0x4] sm:$0xf]
    %v203 = vld [vmem:[#allocation7 + $0x8] sm:$0xf]
    %v204 = vld [vmem:[#allocation7 + $0xc] sm:$0xf]
    %v205 = vld [vmem:[#allocation7 + $0x10] sm:$0xf]
    %v206 = vld [vmem:[#allocation7 + $0x14] sm:$0xf]
    %v207 = vld [vmem:[#allocation7 + $0x18] sm:$0xf]
    %v208 = vld [vmem:[#allocation7 + $0x1c] sm:$0xf]
    %v209 = vld [vmem:[#allocation7 + $0x20] sm:$0xf]
    %v210 = vld [vmem:[#allocation7 + $0x24] sm:$0xf]
    %v211 = vld [vmem:[#allocation7 + $0x28] sm:$0xf]
    %v212 = vld [vmem:[#allocation7 + $0x2c] sm:$0xf]
    %v213 = vld [vmem:[#allocation7 + $0x30] sm:$0xf]
    %v214 = vld [vmem:[#allocation7 + $0x34] sm:$0xf]
    %v215 = vld [vmem:[#allocation7 + $0x38] sm:$0xf]
    %v216 = vld [vmem:[#allocation7 + $0x3c] sm:$0xf]
    %v217 = vld [vmem:[#allocation7 + $0x40] sm:$0xf]
    %v218 = vld [vmem:[#allocation7 + $0x44] sm:$0xf]
    %v219 = vld [vmem:[#allocation7 + $0x48] sm:$0xf]
    %v220 = vld [vmem:[#allocation7 + $0x4c] sm:$0xf]
    %v221 = vld [vmem:[#allocation7 + $0x50] sm:$0xf]
    %v222 = vld [vmem:[#allocation7 + $0x54] sm:$0xf]
    %v223 = vld [vmem:[#allocation7 + $0x58] sm:$0xf]
    %v224 = vld [vmem:[#allocation7 + $0x5c] sm:$0xf]
    %v225 = vld [vmem:[#allocation7 + $0x60] sm:$0xf]
    %v226 = vld [vmem:[#allocation7 + $0x64] sm:$0xf]
    %v227 = vld [vmem:[#allocation7 + $0x68] sm:$0xf]
    %v228 = vld [vmem:[#allocation7 + $0x6c] sm:$0xf]
    %v229 = vld [vmem:[#allocation7 + $0x70] sm:$0xf]
    %v230 = vld [vmem:[#allocation7 + $0x74] sm:$0xf]
    %v231 = vld [vmem:[#allocation7 + $0x78] sm:$0xf]
    %v232 = vld [vmem:[#allocation7 + $0x7c] sm:$0xf]
    %v265 = vunpack.c.l.b16 %v201
    %v266 = vunpack.c.l.b16 %v202
    %v267 = vunpack.c.l.b16 %v203
    %v268 = vunpack.c.l.b16 %v204
    %v269 = vunpack.c.l.b16 %v205
    %v270 = vunpack.c.l.b16 %v206
    %v271 = vunpack.c.l.b16 %v207
    %v272 = vunpack.c.l.b16 %v208
    %v273 = vunpack.c.l.b16 %v209
    %v274 = vunpack.c.l.b16 %v210
    %v275 = vunpack.c.l.b16 %v211
    %v276 = vunpack.c.l.b16 %v212
    %v277 = vunpack.c.l.b16 %v213
    %v278 = vunpack.c.l.b16 %v214
    %v279 = vunpack.c.l.b16 %v215
    %v280 = vunpack.c.l.b16 %v216
    %v281 = vunpack.c.l.b16 %v217
    %v282 = vunpack.c.l.b16 %v218
    %v283 = vunpack.c.l.b16 %v219
    %v284 = vunpack.c.l.b16 %v220
    %v285 = vunpack.c.l.b16 %v221
    %v286 = vunpack.c.l.b16 %v222
    %v287 = vunpack.c.l.b16 %v223
    %v288 = vunpack.c.l.b16 %v224
    %v289 = vunpack.c.l.b16 %v225
    %v290 = vunpack.c.l.b16 %v226
    %v291 = vunpack.c.l.b16 %v227
    %v292 = vunpack.c.l.b16 %v228
    %v293 = vunpack.c.l.b16 %v229
    %v294 = vunpack.c.l.b16 %v230
    %v295 = vunpack.c.l.b16 %v231
    %v296 = vunpack.c.l.b16 %v232
    %v297 = vpack.c.b16 %v266, %v265
    %v298 = vpack.c.b16 %v268, %v267
    %v299 = vpack.c.b16 %v270, %v269
    %v300 = vpack.c.b16 %v272, %v271
    %v301 = vpack.c.b16 %v274, %v273
    %v302 = vpack.c.b16 %v276, %v275
    %v303 = vpack.c.b16 %v278, %v277
    %v304 = vpack.c.b16 %v280, %v279
    %v305 = vpack.c.b16 %v282, %v281
    %v306 = vpack.c.b16 %v284, %v283
    %v307 = vpack.c.b16 %v286, %v285
    %v308 = vpack.c.b16 %v288, %v287
    %v309 = vpack.c.b16 %v290, %v289
    %v310 = vpack.c.b16 %v292, %v291
    %v311 = vpack.c.b16 %v294, %v293
    %v312 = vpack.c.b16 %v296, %v295
    %329 = vmatprep.subr.bf16.mxu0 0
    %330 = vmatpush1.bf16.msra.mxu0 %v297
    %331 = vmatprep.subr.bf16.mxu0 0
    %332 = vmatpush1.bf16.msra.mxu0 %v298
    %333 = vmatprep.subr.bf16.mxu0 0
    %334 = vmatpush1.bf16.msra.mxu0 %v299
    %335 = vmatprep.subr.bf16.mxu0 0
    %336 = vmatpush1.bf16.msra.mxu0 %v300
    %337 = vmatprep.subr.bf16.mxu0 0
    %338 = vmatpush1.bf16.msra.mxu0 %v301
    %339 = vmatprep.subr.bf16.mxu0 0
    %340 = vmatpush1.bf16.msra.mxu0 %v302
    %341 = vmatprep.subr.bf16.mxu0 0
    %342 = vmatpush1.bf16.msra.mxu0 %v303
    %343 = vmatprep.subr.bf16.mxu0 0
    %344 = vmatpush1.bf16.msra.mxu0 %v304
    %345 = vmatprep.subr.bf16.mxu0 0
    %346 = vmatpush1.bf16.msra.mxu0 %v305
    %347 = vmatprep.subr.bf16.mxu0 0
    %348 = vmatpush1.bf16.msra.mxu0 %v306
    %349 = vmatprep.subr.bf16.mxu0 0
    %350 = vmatpush1.bf16.msra.mxu0 %v307
    %351 = vmatprep.subr.bf16.mxu0 0
    %352 = vmatpush1.bf16.msra.mxu0 %v308
    %353 = vmatprep.subr.bf16.mxu0 0
    %354 = vmatpush1.bf16.msra.mxu0 %v309
    %355 = vmatprep.subr.bf16.mxu0 0
    %356 = vmatpush1.bf16.msra.mxu0 %v310
    %357 = vmatprep.subr.bf16.mxu0 0
    %358 = vmatpush1.bf16.msra.mxu0 %v311
    %359 = vmatprep.subr.bf16.mxu0 0
    %360 = vmatpush1.bf16.msra.mxu0 %v312
    %361 = vmatprep.mubr.bf16.mxu0 %v200
    %362 = vmatmul.mubr.bf16.gmra.mrb[0].mxu0 %v199
    %v363 = vpop.f32.mrb[0].mxu0
    %v364 = vadd.f32 0.0, %v363
    %v365 = vpop.f32.mrb[0].mxu0
    %v366 = vpop.f32.mrb[0].mxu0
    %v367 = vpop.f32.mrb[0].mxu0
    %368 = vdwg.mxu0
    %v369 = vpack.c.bf16 %v364, %v364
    %v370 = vld [vmem:[%s4] sm:$0x1]
    %v372 = vshrl.u32 %v370, 16
    %v373 = vpack.i.b16 %v372, %v372
    %v375 = vlaneseq
    %v376 = vshrl.u32 %v375, 7
    %v377 = vsub.s32 0, %v376
    %v378 = vrot.slane %v373, %v377
    %v379 = vadd.bf16 %v369, %v378
    %v380 = vmax.bf16 %v379, 0
    %v381 = vld [vmem:[#allocation8] sm:$0xf]
    %v382 = vld [vmem:[#allocation8 + $0x4] sm:$0xf]
    %v383 = vld [vmem:[#allocation8 + $0x8] sm:$0xf]
    %v384 = vld [vmem:[#allocation8 + $0xc] sm:$0xf]
    %v385 = vld [vmem:[#allocation8 + $0x10] sm:$0xf]
    %v386 = vld [vmem:[#allocation8 + $0x14] sm:$0xf]
    %v387 = vld [vmem:[#allocation8 + $0x18] sm:$0xf]
    %v388 = vld [vmem:[#allocation8 + $0x1c] sm:$0xf]
    %v389 = vld [vmem:[#allocation8 + $0x20] sm:$0xf]
    %v390 = vld [vmem:[#allocation8 + $0x24] sm:$0xf]
    %v391 = vld [vmem:[#allocation8 + $0x28] sm:$0xf]
    %v392 = vld [vmem:[#allocation8 + $0x2c] sm:$0xf]
    %v393 = vld [vmem:[#allocation8 + $0x30] sm:$0xf]
    %v394 = vld [vmem:[#allocation8 + $0x34] sm:$0xf]
    %v395 = vld [vmem:[#allocation8 + $0x38] sm:$0xf]
    %v396 = vld [vmem:[#allocation8 + $0x3c] sm:$0xf]
    %v413 = vunpack.c.l.b16 %v381
    %v414 = vunpack.c.l.b16 %v382
    %v415 = vunpack.c.l.b16 %v383
    %v416 = vunpack.c.l.b16 %v384
    %v417 = vunpack.c.l.b16 %v385
    %v418 = vunpack.c.l.b16 %v386
    %v419 = vunpack.c.l.b16 %v387
    %v420 = vunpack.c.l.b16 %v388
    %v421 = vunpack.c.l.b16 %v389
    %v422 = vunpack.c.l.b16 %v390
    %v423 = vunpack.c.l.b16 %v391
    %v424 = vunpack.c.l.b16 %v392
    %v425 = vunpack.c.l.b16 %v393
    %v426 = vunpack.c.l.b16 %v394
    %v427 = vunpack.c.l.b16 %v395
    %v428 = vunpack.c.l.b16 %v396
    %v429 = vpack.c.b16 %v414, %v413
    %v430 = vpack.c.b16 %v416, %v415
    %v431 = vpack.c.b16 %v418, %v417
    %v432 = vpack.c.b16 %v420, %v419
    %v433 = vpack.c.b16 %v422, %v421
    %v434 = vpack.c.b16 %v424, %v423
    %v435 = vpack.c.b16 %v426, %v425
    %v436 = vpack.c.b16 %v428, %v427
    %445 = vmatprep.subr.bf16.mxu0 0
    %446 = vmatpush1.bf16.msra.mxu0 %v429
    %447 = vmatprep.subr.bf16.mxu0 0
    %448 = vmatpush1.bf16.msra.mxu0 %v430
    %449 = vmatprep.subr.bf16.mxu0 0
    %450 = vmatpush1.bf16.msra.mxu0 %v431
    %451 = vmatprep.subr.bf16.mxu0 0
    %452 = vmatpush1.bf16.msra.mxu0 %v432
    %453 = vmatprep.subr.bf16.mxu0 0
    %454 = vmatpush1.bf16.msra.mxu0 %v433
    %455 = vmatprep.subr.bf16.mxu0 0
    %456 = vmatpush1.bf16.msra.mxu0 %v434
    %457 = vmatprep.subr.bf16.mxu0 0
    %458 = vmatpush1.bf16.msra.mxu0 %v435
    %459 = vmatprep.subr.bf16.mxu0 0
    %460 = vmatpush1.bf16.msra.mxu0 %v436
    %461 = vmatprep.subr.bf16.mxu0 0
    %462 = vmatpush1.bf16.msra.mxu0 0
    %463 = vmatprep.subr.bf16.mxu0 0
    %464 = vmatpush1.bf16.msra.mxu0 0
    %465 = vmatprep.subr.bf16.mxu0 0
    %466 = vmatpush1.bf16.msra.mxu0 0
    %467 = vmatprep.subr.bf16.mxu0 0
    %468 = vmatpush1.bf16.msra.mxu0 0
    %469 = vmatprep.subr.bf16.mxu0 0
    %470 = vmatpush1.bf16.msra.mxu0 0
    %471 = vmatprep.subr.bf16.mxu0 0
    %472 = vmatpush1.bf16.msra.mxu0 0
    %473 = vmatprep.subr.bf16.mxu0 0
    %474 = vmatpush1.bf16.msra.mxu0 0
    %475 = vmatprep.subr.bf16.mxu0 0
    %476 = vmatpush1.bf16.msra.mxu0 0
    %477 = vmatprep.mubr.bf16.mxu0 0
    %478 = vmatmul.mubr.bf16.gmra.mrb[0].mxu0 %v380
    %v479 = vpop.f32.mrb[0].mxu0
    %v480 = vadd.f32 0.0, %v479
    %v481 = vpop.f32.mrb[0].mxu0
    %v482 = vpop.f32.mrb[0].mxu0
    %v483 = vpop.f32.mrb[0].mxu0
    %484 = vdwg.mxu0
    %v485 = vpack.c.bf16 %v480, %v480
    %v486 = vld [vmem:[%s4] sm:$0x2]
    %v488 = vpack.i.b16 %v486, %v486
    %v490 = vlaneseq
    %v491 = vshrl.u32 %v490, 7
    %v492 = vsub.s32 1, %v491
    %v493 = vrot.slane %v488, %v492
    %v494 = vadd.bf16 %v485, %v493
    %v495 = vmax.bf16 %v494, 0
    %s496 = scalar_lea.vmem [#allocation8], 64
    %v497 = vld [vmem:[%s496] sm:$0xf]
    %v498 = vld [vmem:[%s496 + $0x4] sm:$0xf]
    %v499 = vld [vmem:[%s496 + $0x8] sm:$0xf]
    %v500 = vld [vmem:[%s496 + $0xc] sm:$0xf]
    %v501 = vld [vmem:[%s496 + $0x10] sm:$0xf]
    %v502 = vld [vmem:[%s496 + $0x14] sm:$0xf]
    %v503 = vld [vmem:[%s496 + $0x18] sm:$0xf]
    %v504 = vld [vmem:[%s496 + $0x1c] sm:$0xf]
    %v505 = vld [vmem:[%s496 + $0x20] sm:$0xf]
    %v506 = vld [vmem:[%s496 + $0x24] sm:$0xf]
    %v507 = vld [vmem:[%s496 + $0x28] sm:$0xf]
    %v508 = vld [vmem:[%s496 + $0x2c] sm:$0xf]
    %v509 = vld [vmem:[%s496 + $0x30] sm:$0xf]
    %v510 = vld [vmem:[%s496 + $0x34] sm:$0xf]
    %v511 = vld [vmem:[%s496 + $0x38] sm:$0xf]
    %v512 = vld [vmem:[%s496 + $0x3c] sm:$0xf]
    %v513 = vunpack.c.l.bf16 %v486
    %v514 = vlaneseq
    %v515 = vshrl.u32 %v514, 7
    %v516 = vsub.s32 3, %v515
    %v517 = vrot.slane %v513, %v516
    %v534 = vunpack.c.l.b16 %v497
    %v535 = vunpack.c.l.b16 %v498
    %v536 = vunpack.c.l.b16 %v499
    %v537 = vunpack.c.l.b16 %v500
    %v538 = vunpack.c.l.b16 %v501
    %v539 = vunpack.c.l.b16 %v502
    %v540 = vunpack.c.l.b16 %v503
    %v541 = vunpack.c.l.b16 %v504
    %v542 = vunpack.c.l.b16 %v505
    %v543 = vunpack.c.l.b16 %v506
    %v544 = vunpack.c.l.b16 %v507
    %v545 = vunpack.c.l.b16 %v508
    %v546 = vunpack.c.l.b16 %v509
    %v547 = vunpack.c.l.b16 %v510
    %v548 = vunpack.c.l.b16 %v511
    %v549 = vunpack.c.l.b16 %v512
    %v550 = vpack.c.b16 %v535, %v534
    %v551 = vpack.c.b16 %v537, %v536
    %v552 = vpack.c.b16 %v539, %v538
    %v553 = vpack.c.b16 %v541, %v540
    %v554 = vpack.c.b16 %v543, %v542
    %v555 = vpack.c.b16 %v545, %v544
    %v556 = vpack.c.b16 %v547, %v546
    %v557 = vpack.c.b16 %v549, %v548
    %566 = vmatprep.subr.bf16.mxu0 0
    %567 = vmatpush1.bf16.msra.mxu0 %v550
    %568 = vmatprep.subr.bf16.mxu0 0
    %569 = vmatpush1.bf16.msra.mxu0 %v551
    %570 = vmatprep.subr.bf16.mxu0 0
    %571 = vmatpush1.bf16.msra.mxu0 %v552
    %572 = vmatprep.subr.bf16.mxu0 0
    %573 = vmatpush1.bf16.msra.mxu0 %v553
    %574 = vmatprep.subr.bf16.mxu0 0
    %575 = vmatpush1.bf16.msra.mxu0 %v554
    %576 = vmatprep.subr.bf16.mxu0 0
    %577 = vmatpush1.bf16.msra.mxu0 %v555
    %578 = vmatprep.subr.bf16.mxu0 0
    %579 = vmatpush1.bf16.msra.mxu0 %v556
    %580 = vmatprep.subr.bf16.mxu0 0
    %581 = vmatpush1.bf16.msra.mxu0 %v557
    %582 = vmatprep.subr.bf16.mxu0 0
    %583 = vmatpush1.bf16.msra.mxu0 0
    %584 = vmatprep.subr.bf16.mxu0 0
    %585 = vmatpush1.bf16.msra.mxu0 0
    %586 = vmatprep.subr.bf16.mxu0 0
    %587 = vmatpush1.bf16.msra.mxu0 0
    %588 = vmatprep.subr.bf16.mxu0 0
    %589 = vmatpush1.bf16.msra.mxu0 0
    %590 = vmatprep.subr.bf16.mxu0 0
    %591 = vmatpush1.bf16.msra.mxu0 0
    %592 = vmatprep.subr.bf16.mxu0 0
    %593 = vmatpush1.bf16.msra.mxu0 0
    %594 = vmatprep.subr.bf16.mxu0 0
    %595 = vmatpush1.bf16.msra.mxu0 0
    %596 = vmatprep.subr.bf16.mxu0 0
    %597 = vmatpush1.bf16.msra.mxu0 0
    %598 = vmatprep.mubr.bf16.mxu0 0
    %599 = vmatmul.mubr.bf16.gmra.mrb[0].mxu0 %v495
    %v600 = vpop.f32.mrb[0].mxu0
    %v601 = vadd.f32 %v517, %v600
    %v602 = vpop.f32.mrb[0].mxu0
    %v603 = vpop.f32.mrb[0].mxu0
    %v604 = vpop.f32.mrb[0].mxu0
    %605 = vdwg.mxu0
    %v606 = vmax.f32 %v601, 0.0
    %607 = vxpose.xlu0.b32.start [1/16] %v606, 128
    %608 = vxpose.xlu0.b32.cont [2/16] 0.0, 128
    %609 = vxpose.xlu0.b32.cont [3/16] 0.0, 128
    %610 = vxpose.xlu0.b32.cont [4/16] 0.0, 128
    %611 = vxpose.xlu0.b32.cont [5/16] 0.0, 128
    %612 = vxpose.xlu0.b32.cont [6/16] 0.0, 128
    %613 = vxpose.xlu0.b32.cont [7/16] 0.0, 128
    %614 = vxpose.xlu0.b32.cont [8/16] 0.0, 128
    %615 = vxpose.xlu0.b32.cont [9/16] 0.0, 128
    %616 = vxpose.xlu0.b32.cont [10/16] 0.0, 128
    %617 = vxpose.xlu0.b32.cont [11/16] 0.0, 128
    %618 = vxpose.xlu0.b32.cont [12/16] 0.0, 128
    %619 = vxpose.xlu0.b32.cont [13/16] 0.0, 128
    %620 = vxpose.xlu0.b32.cont [14/16] 0.0, 128
    %621 = vxpose.xlu0.b32.cont [15/16] 0.0, 128
    %622 = vxpose.xlu0.b32.end [16/16] 0.0, 128
    %v623 = vpop.trf.xlu0
    %v624 = vpop.trf.xlu0
    %v625 = vpop.trf.xlu0
    %v626 = vpop.trf.xlu0
    %v627 = vpop.trf.xlu0
    %v628 = vpop.trf.xlu0
    %v629 = vpop.trf.xlu0
    %v630 = vpop.trf.xlu0
    %v631 = vpop.trf.xlu0
    %v632 = vpop.trf.xlu0
    %v633 = vpop.trf.xlu0
    %v634 = vpop.trf.xlu0
    %v635 = vpop.trf.xlu0
    %v636 = vpop.trf.xlu0
    %v637 = vpop.trf.xlu0
    %v638 = vpop.trf.xlu0
    %v639 = vpack.c.bf16 %v624, %v623
    %v640 = vpack.c.bf16 %v626, %v625
    %v641 = vpack.c.bf16 %v628, %v627
    %v642 = vpack.c.bf16 %v630, %v629
    %v643 = vpack.c.bf16 %v632, %v631
    %v644 = vpack.c.bf16 %v634, %v633
    %v645 = vpack.c.bf16 %v636, %v635
    %v646 = vpack.c.bf16 %v638, %v637
    %s647 = scalar_lea.vmem [#allocation8], 128
    %v648 = vld [vmem:[%s647] sm:$0xf]
    %649 = vmatprep.subr.bf16.mxu0 0
    %650 = vmatpush1.bf16.msra.mxu0 %v639
    %651 = vmatprep.subr.bf16.mxu0 0
    %652 = vmatpush1.bf16.msra.mxu0 %v640
    %653 = vmatprep.subr.bf16.mxu0 0
    %654 = vmatpush1.bf16.msra.mxu0 %v641
    %655 = vmatprep.subr.bf16.mxu0 0
    %656 = vmatpush1.bf16.msra.mxu0 %v642
    %657 = vmatprep.subr.bf16.mxu0 0
    %658 = vmatpush1.bf16.msra.mxu0 %v643
    %659 = vmatprep.subr.bf16.mxu0 0
    %660 = vmatpush1.bf16.msra.mxu0 %v644
    %661 = vmatprep.subr.bf16.mxu0 0
    %662 = vmatpush1.bf16.msra.mxu0 %v645
    %663 = vmatprep.subr.bf16.mxu0 0
    %664 = vmatpush1.bf16.msra.mxu0 %v646
    %665 = vmatprep.subr.bf16.mxu0 0
    %666 = vmatpush1.bf16.msra.mxu0 0
    %667 = vmatprep.subr.bf16.mxu0 0
    %668 = vmatpush1.bf16.msra.mxu0 0
    %669 = vmatprep.subr.bf16.mxu0 0
    %670 = vmatpush1.bf16.msra.mxu0 0
    %671 = vmatprep.subr.bf16.mxu0 0
    %672 = vmatpush1.bf16.msra.mxu0 0
    %673 = vmatprep.subr.bf16.mxu0 0
    %674 = vmatpush1.bf16.msra.mxu0 0
    %675 = vmatprep.subr.bf16.mxu0 0
    %676 = vmatpush1.bf16.msra.mxu0 0
    %677 = vmatprep.subr.bf16.mxu0 0
    %678 = vmatpush1.bf16.msra.mxu0 0
    %679 = vmatprep.subr.bf16.mxu0 0
    %680 = vmatpush1.bf16.msra.mxu0 0
    %681 = vmatprep.mubr.bf16.mxu0 0
    %682 = vmatmul.mubr.bf16.gmra.mrb[0].mxu0 %v648
    %v683 = vpop.f32.mrb[0].mxu0
    %v684 = vadd.f32 0.0, %v683
    %v685 = vpop.f32.mrb[0].mxu0
    %v686 = vpop.f32.mrb[0].mxu0
    %v687 = vpop.f32.mrb[0].mxu0
    %688 = vdwg.mxu0
    %vm689 = vcmask 64512
    %690 = vst.msk [vmem:[#allocation10] sm:$0xff] %vm689, %v684
    // Predicated region
    $region38: #{tpu_custom_call.1} parent=1 // pred_check
      _
    $region39: #{tpu_custom_call.1} parent=1 // pred_check_branch
      %692 = sbr.rel (0) target = $region41
    $region40: #{tpu_custom_call.1} parent=1 // pred_region
      %s694 = ssub.s32 128, 128
      %695 = vsyncadd [#allocation4], %s694
      %s697 = sshll.u32 [#allocation10], 4
      %s698 = int_to_ptr.vmem [resolvable:$true] %s697
      %700 = dma.vmem_to_hbm [thread:$0]  %s698, 128, %s5, [#allocation4]
    $region41: #{tpu_custom_call.1} parent=1 // pred_fallthru
      _
    // Predicated region
    $region42: #{tpu_custom_call.1} parent=1 // pred_check
      _
    $region43: #{tpu_custom_call.1} parent=1 // pred_check_branch
      %702 = sbr.rel (0) target = $region45
    $region44: #{tpu_custom_call.1} parent=1 // pred_region
      %703 = dma.done [#allocation4], 128
    $region45: #{tpu_custom_call.1} parent=1 // pred_fallthru
      _
    %704 = vsyncpa [#allocation3], 1
    %705 = vsyncpa [#allocation6], 1
    %706 = vsyncpa [#allocation9], 1
    %707 = vsyncpa [#allocation4], 1

</llo_original>
